<compile_context>
chip_gen: v6e
topology: v6e:2x2x1
jax: 0.10.0
libtpu: 0.0.40
codegen_flags: <defaults>
</compile_context>

<pallas_src>
import jax
import jax.numpy as jnp
from jax.experimental import pallas as pl
from jax.experimental.pallas import tpu as pltpu

_LANE = 128
_SUBLANE = 8
_ROW_ALIGN = 16  # sublane alignment that also covers bf16/f16 packed tiles


def _partial_sq_kernel(p_ref, t_ref, acc_ref):
    """Unweighted: accumulate per-vreg partial sums of (p - t)^2 for this tile."""
    step = pl.program_id(1)

    @pl.when(step == 0)
    def _init():
        acc_ref[...] = jnp.zeros_like(acc_ref)

    d = p_ref[...].astype(jnp.float32) - t_ref[...].astype(jnp.float32)
    sq = d * d                                                  # (tr, 128) f32
    # VALU-only reduction to one (8, 128) vreg; cross-lane reduce + sqrt are
    # done in the wrapper after summing the per-core partials.
    part = jnp.sum(sq.reshape(-1, _SUBLANE, _LANE), axis=0)     # (8, 128)
    acc_ref[...] += part[None]


def _partial_sq_kernel_weighted(p_ref, t_ref, w_ref, acc_ref):
    """Weighted: same, with a per-element weight (sample weight repeated D times)."""
    step = pl.program_id(1)

    @pl.when(step == 0)
    def _init():
        acc_ref[...] = jnp.zeros_like(acc_ref)

    d = p_ref[...].astype(jnp.float32) - t_ref[...].astype(jnp.float32)
    sq = d * d * w_ref[...].astype(jnp.float32)
    part = jnp.sum(sq.reshape(-1, _SUBLANE, _LANE), axis=0)
    acc_ref[...] += part[None]


def _round_up(x, m):
    return -(-x // m) * m


def _keep_narrow_float(x):
    """Keep f32/bf16/f16 as-is (no wrapper upcast); convert anything else to f32."""
    x = jnp.asarray(x)
    if jnp.issubdtype(x.dtype, jnp.floating) and x.dtype.itemsize <= 4:
        return x
    return x.astype(jnp.float32)


def weighted_rmse_loss(predictions, targets, sample_weight=None, *,
                       rows_per_tile=4096, num_cores=2):
    """Pallas implementation of WeightedRMSELoss.forward. Returns an f32 scalar."""
    predictions = _keep_narrow_float(predictions)
    targets = _keep_narrow_float(targets)
    B, D = predictions.shape
    n_elems = B * D
    inv_n = 1.0 / float(n_elems)  # GLOBAL element count (true, unpadded)

    # ---- layout: free row-major flatten + small tail pad to (r_pad, 128) ----
    n_rows = -(-n_elems // _LANE)
    tr_req = max(_ROW_ALIGN, _round_up(int(rows_per_tile), _ROW_ALIGN))

    if n_rows <= tr_req:
        nc, steps = 1, 1
        tr = _round_up(n_rows, _ROW_ALIGN)
        r_pad = tr
    else:
        tr = tr_req
        n_tiles = -(-n_rows // tr)
        nc = num_cores if n_tiles >= 2 else 1
        n_tiles = _round_up(n_tiles, nc)
        steps = n_tiles // nc
        r_pad = n_tiles * tr

    pad = r_pad * _LANE - n_elems

    def _slab(x):
        flat = x.reshape(n_elems)          # row-major flatten: free
        if pad:
            flat = jnp.pad(flat, (0, pad))  # only the tail; zeros contribute 0
        return flat.reshape(r_pad, _LANE)

    p = _slab(predictions)
    t = _slab(targets)

    grid = (nc, steps)
    in_spec = pl.BlockSpec((tr, _LANE), lambda c, k: (c * steps + k, 0))
    out_spec = pl.BlockSpec((1, _SUBLANE, _LANE), lambda c, k: (c, 0, 0))
    out_shape = jax.ShapeDtypeStruct((nc, _SUBLANE, _LANE), jnp.float32)
    cparams = pltpu.CompilerParams(
        dimension_semantics=("parallel", "arbitrary"),
        vmem_limit_bytes=32 * 1024 * 1024,
    )

    if sample_weight is None:
        # Unweighted path: no ones() weight materialized or DMA'd.
        cost = pl.CostEstimate(
            flops=3 * n_elems, transcendentals=0,
            bytes_accessed=p.size * p.dtype.itemsize + t.size * t.dtype.itemsize)
        partials = pl.pallas_call(
            _partial_sq_kernel,
            out_shape=out_shape,
            grid=grid,
            in_specs=[in_spec, in_spec],
            out_specs=out_spec,
            compiler_params=cparams,
            cost_estimate=cost,
        )(p, t)
    else:
        w = _keep_narrow_float(sample_weight).reshape(-1)
        w = _slab(jnp.repeat(w, D))  # per-element weight, lines up with flatten
        cost = pl.CostEstimate(
            flops=4 * n_elems, transcendentals=0,
            bytes_accessed=(p.size * p.dtype.itemsize
                            + t.size * t.dtype.itemsize
                            + w.size * w.dtype.itemsize))
        partials = pl.pallas_call(
            _partial_sq_kernel_weighted,
            out_shape=out_shape,
            grid=grid,
            in_specs=[in_spec, in_spec, in_spec],
            out_specs=out_spec,
            compiler_params=cparams,
            cost_estimate=cost,
        )(p, t, w)

    # Finalize in the wrapper: one tiny cross-lane reduce over (nc, 8, 128).
    return jnp.sqrt(jnp.sum(partials) * jnp.float32(inv_n))


def _reference(predictions, targets, sample_weight=None):
    p = jnp.asarray(predictions, jnp.float32)
    t = jnp.asarray(targets, jnp.float32)
    loss = (p - t) ** 2
    if sample_weight is not None:
        loss = loss * jnp.asarray(sample_weight, jnp.float32).reshape(-1, 1)
    loss = loss.mean(axis=1)
    return jnp.sqrt(loss.mean())


if __name__ == "__main__":
    key = jax.random.PRNGKey(0)
    kp, kt, kw = jax.random.split(key, 3)

    # Small shapes consistent with the module: predictions/targets (batch, 2).
    B = 8
    predictions = jax.random.normal(kp, (B, 2), dtype=jnp.float32)
    targets = jax.random.normal(kt, (B, 2), dtype=jnp.float32)
    sample_weight = jax.random.uniform(kw, (B,), dtype=jnp.float32) + 0.5

    # Weighted case.
    out_w = jax.block_until_ready(
        weighted_rmse_loss(predictions, targets, sample_weight))
    ref_w = _reference(predictions, targets, sample_weight)
    assert jnp.allclose(out_w, ref_w, rtol=1e-5, atol=1e-6), (out_w, ref_w)

    # Unweighted case (no weight array is materialized or DMA'd).
    out_u = jax.block_until_ready(weighted_rmse_loss(predictions, targets))
    ref_u = _reference(predictions, targets)
    assert jnp.allclose(out_u, ref_u, rtol=1e-5, atol=1e-6), (out_u, ref_u)

    # Larger, non-multiple-of-128 batch with a small tile so the multi-step
    # (parallel, arbitrary) accumulator path and the dual-core output split
    # are exercised.
    B2 = 5000
    kp2, kt2, kw2 = jax.random.split(jax.random.PRNGKey(0), 3)
    p2 = jax.random.normal(kp2, (B2, 2), dtype=jnp.float32)
    t2 = jax.random.normal(kt2, (B2, 2), dtype=jnp.float32)
    w2 = jax.random.uniform(kw2, (B2,), dtype=jnp.float32) + 0.5
    out_2 = jax.block_until_ready(
        weighted_rmse_loss(p2, t2, w2, rows_per_tile=16))
    ref_2 = _reference(p2, t2, w2)
    assert jnp.allclose(out_2, ref_2, rtol=1e-4, atol=1e-5), (out_2, ref_2)

    # bf16 inputs stay bf16 on the wire (half the HBM read bytes); the kernel
    # casts to f32 on load so accumulation stays accurate.
    pb = p2.astype(jnp.bfloat16)
    tb = t2.astype(jnp.bfloat16)
    out_b = jax.block_until_ready(
        weighted_rmse_loss(pb, tb, w2, rows_per_tile=16))
    ref_b = _reference(pb.astype(jnp.float32), tb.astype(jnp.float32), w2)
    assert jnp.allclose(out_b, ref_b, rtol=2e-2, atol=1e-2), (out_b, ref_b)

    print("KERNEL_OK")
</pallas_src>

<mosaic_0001>
module attributes {stable_mosaic.version = 11 : i64} {
  func.func @_partial_sq_kernel_weighted(%arg0: i32, %arg1: i32, %arg2: memref<16x128xf32, #tpu.memory_space<vmem>>, %arg3: memref<16x128xf32, #tpu.memory_space<vmem>>, %arg4: memref<16x128xf32, #tpu.memory_space<vmem>>, %arg5: memref<1x8x128xf32, #tpu.memory_space<vmem>>) attributes {dimension_semantics = [#tpu.dimension_semantics<parallel>, #tpu.dimension_semantics<arbitrary>], iteration_bounds = array<i64: 1, 1>, scalar_prefetch = 0 : i64, scratch_operands = 0 : i64, tpu.core_type = #tpu.core_type<tc>, window_params = [{transform_indices = @transform_0, window_bounds = array<i64: 16, 128>}, {transform_indices = @transform_1, window_bounds = array<i64: 16, 128>}, {transform_indices = @transform_2, window_bounds = array<i64: 16, 128>}, {transform_indices = @transform_3, window_bounds = array<i64: 1, 8, 128>}]} {
    %c0_i32 = arith.constant 0 : i32
    %0 = arith.cmpi eq, %arg1, %c0_i32 : i32
    %1 = arith.extui %0 : i1 to i32
    %c0_i32_0 = arith.constant 0 : i32
    %2 = arith.cmpi ne, %1, %c0_i32_0 : i32
    scf.if %2 {
      %cst_12 = arith.constant 0.000000e+00 : f32
      %15 = vector.broadcast %cst_12 : f32 to vector<1x8x128xf32>
      %c0_13 = arith.constant 0 : index
      %c0_14 = arith.constant 0 : index
      %c0_15 = arith.constant 0 : index
      %16 = vector.load %arg5[%c0_13, %c0_14, %c0_15] : memref<1x8x128xf32, #tpu.memory_space<vmem>>, vector<1x8x128xf32>
      tpu.vector_store %arg5[%c0_13, %c0_14, %c0_15], %15 {strides = array<i32>} : memref<1x8x128xf32, #tpu.memory_space<vmem>>, vector<1x8x128xf32>,
    } else {
    }
    %c0 = arith.constant 0 : index
    %c0_1 = arith.constant 0 : index
    %3 = vector.load %arg2[%c0, %c0_1] : memref<16x128xf32, #tpu.memory_space<vmem>>, vector<16x128xf32>
    %c0_2 = arith.constant 0 : index
    %c0_3 = arith.constant 0 : index
    %4 = vector.load %arg3[%c0_2, %c0_3] : memref<16x128xf32, #tpu.memory_space<vmem>>, vector<16x128xf32>
    %5 = arith.subf %3, %4 : vector<16x128xf32>
    %6 = arith.mulf %5, %5 : vector<16x128xf32>
    %c0_4 = arith.constant 0 : index
    %c0_5 = arith.constant 0 : index
    %7 = vector.load %arg4[%c0_4, %c0_5] : memref<16x128xf32, #tpu.memory_space<vmem>>, vector<16x128xf32>
    %8 = arith.mulf %6, %7 : vector<16x128xf32>
    %9 = vector.shape_cast %8 : vector<16x128xf32> to vector<2x8x128xf32>
    %cst = arith.constant dense<0.000000e+00> : vector<8x128xf32>
    %10 = vector.multi_reduction <add>, %9, %cst [0] : vector<2x8x128xf32> to vector<8x128xf32>
    %c0_6 = arith.constant 0 : index
    %c0_7 = arith.constant 0 : index
    %c0_8 = arith.constant 0 : index
    %11 = vector.load %arg5[%c0_6, %c0_7, %c0_8] : memref<1x8x128xf32, #tpu.memory_space<vmem>>, vector<1x8x128xf32>
    %12 = vector.shape_cast %10 : vector<8x128xf32> to vector<1x8x128xf32>
    %13 = arith.addf %11, %12 : vector<1x8x128xf32>
    %c0_9 = arith.constant 0 : index
    %c0_10 = arith.constant 0 : index
    %c0_11 = arith.constant 0 : index
    %14 = vector.load %arg5[%c0_9, %c0_10, %c0_11] : memref<1x8x128xf32, #tpu.memory_space<vmem>>, vector<1x8x128xf32>
    tpu.vector_store %arg5[%c0_9, %c0_10, %c0_11], %13 {strides = array<i32>} : memref<1x8x128xf32, #tpu.memory_space<vmem>>, vector<1x8x128xf32>,
    return
  }
  func.func @transform_0(%arg0: i32, %arg1: i32) -> (i32, i32) {
    %c1_i32 = arith.constant 1 : i32
    %0 = arith.muli %arg0, %c1_i32 : i32
    %1 = arith.addi %0, %arg1 : i32
    %c0_i32 = arith.constant 0 : i32
    %c0_i32_0 = arith.constant 0 : i32
    return %1, %c0_i32 : i32, i32
  }
  func.func @transform_1(%arg0: i32, %arg1: i32) -> (i32, i32) {
    %c1_i32 = arith.constant 1 : i32
    %0 = arith.muli %arg0, %c1_i32 : i32
    %1 = arith.addi %0, %arg1 : i32
    %c0_i32 = arith.constant 0 : i32
    %c0_i32_0 = arith.constant 0 : i32
    return %1, %c0_i32 : i32, i32
  }
  func.func @transform_2(%arg0: i32, %arg1: i32) -> (i32, i32) {
    %c1_i32 = arith.constant 1 : i32
    %0 = arith.muli %arg0, %c1_i32 : i32
    %1 = arith.addi %0, %arg1 : i32
    %c0_i32 = arith.constant 0 : i32
    %c0_i32_0 = arith.constant 0 : i32
    return %1, %c0_i32 : i32, i32
  }
  func.func @transform_3(%arg0: i32, %arg1: i32) -> (i32, i32, i32) {
    %c0_i32 = arith.constant 0 : i32
    %c0_i32_0 = arith.constant 0 : i32
    %c0_i32_1 = arith.constant 0 : i32
    return %arg0, %c0_i32, %c0_i32_0 : i32, i32, i32
  }
}

</mosaic_0001>

<llo_original>
// kernel: tpu_custom_call.1
$region0: #{tpu_custom_call.1}
  #allocation0 [shape = 'u32[]', space=smem, size = 0x4, offset = 0x4, fixed_abs, tag = 'smem constant byte address 0x4 - core index']
  #allocation1 [shape = 'u32[144,128]{1,0:T(1,128)}', space=vmem, size = 0x12000, scoped, tag = 'internal scratch']
  %s0 = inlined_call_operand.hbm [shape: f32[16,128], index: 0, kind: input, shape index: {}]
  %s1 = inlined_call_operand.hbm [shape: f32[16,128], index: 1, kind: input, shape index: {}]
  %s2 = inlined_call_operand.hbm [shape: f32[16,128], index: 2, kind: input, shape index: {}]
  %s3 = inlined_call_operand.hbm [shape: f32[1,8,128], index: 3, kind: output, shape index: {}]
  %s4 = sld [smem:[#allocation0]]
  $region38: #{tpu_custom_call.1} parent=0
    _
  %s6 = ssub.s32 1, %s4
  %s7 = scalar_select 0, %s6, %s4
  $region1: #{tpu_custom_call.1} parent=0
    #allocation2 [shape = 'u8[8192]{0}', space=vmem, size = 0x2000, scoped, tag = 'input window, operand 0, single buffered']
    #allocation3 [shape = 's32[1]{0}', space=sflag, size = 0x4, scoped, tag = 'scoped memory for tpu_custom_call.1']
    #allocation4 [shape = 's32[1]{0}', space=sflag, size = 0x4, scoped, tag = 'scoped memory for tpu_custom_call.1']
    #allocation5 [shape = 'u8[8192]{0}', space=vmem, size = 0x2000, scoped, tag = 'input window, operand 1, single buffered']
    #allocation6 [shape = 's32[1]{0}', space=sflag, size = 0x4, scoped, tag = 'scoped memory for tpu_custom_call.1']
    #allocation7 [shape = 'u8[8192]{0}', space=vmem, size = 0x2000, scoped, tag = 'input window, operand 2, single buffered']
    #allocation8 [shape = 'u8[4096]{0}', space=vmem, size = 0x1000, scoped, tag = 'output window, operand 0, single buffered']
    %8 = vsyncpa [#allocation3], 0
    %9 = vsyncpa [#allocation6], 0
    %10 = vsyncpa [#allocation4], 0
    // Predicated region
    $region2: #{tpu_custom_call.1} parent=1 // pred_check
      _
    $region3: #{tpu_custom_call.1} parent=1 // pred_check_branch
      %12 = sbr.rel (0) target = $region5
    $region4: #{tpu_custom_call.1} parent=1 // pred_region
      %s13 = sadd.s32 0, 0
      %s14 = smul.u32 2, %s13
      %s16 = ssub.s32 256, 256
      %17 = vsyncadd [#allocation3], %s16
      %s18 = smul.addr %s14, 128
      %s19 = scalar_lea.hbm %s0, %s18
      %s20 = sshll.u32 [#allocation2], 4
      %s21 = int_to_ptr.vmem [resolvable:$true] %s20
      %26 = dma.hbm_to_vmem [thread:$0]  %s19, 256, %s21, [#allocation3], 128, 128, 8
    $region5: #{tpu_custom_call.1} parent=1 // pred_fallthru
      _
    // Predicated region
    $region6: #{tpu_custom_call.1} parent=1 // pred_check
      _
    $region7: #{tpu_custom_call.1} parent=1 // pred_check_branch
      %28 = sbr.rel (0) target = $region9
    $region8: #{tpu_custom_call.1} parent=1 // pred_region
      %s29 = sadd.s32 0, 0
      %s30 = smul.u32 2, %s29
      %s32 = ssub.s32 256, 256
      %33 = vsyncadd [#allocation6], %s32
      %s34 = smul.addr %s30, 128
      %s35 = scalar_lea.hbm %s1, %s34
      %s36 = sshll.u32 [#allocation5], 4
      %s37 = int_to_ptr.vmem [resolvable:$true] %s36
      %42 = dma.hbm_to_vmem [thread:$0]  %s35, 256, %s37, [#allocation6], 128, 128, 8
    $region9: #{tpu_custom_call.1} parent=1 // pred_fallthru
      _
    // Predicated region
    $region10: #{tpu_custom_call.1} parent=1 // pred_check
      _
    $region11: #{tpu_custom_call.1} parent=1 // pred_check_branch
      %44 = sbr.rel (0) target = $region13
    $region12: #{tpu_custom_call.1} parent=1 // pred_region
      %s45 = sadd.s32 0, 0
      %s46 = smul.u32 2, %s45
      %s48 = ssub.s32 256, 256
      %49 = vsyncadd [#allocation6], %s48
      %s50 = smul.addr %s46, 128
      %s51 = scalar_lea.hbm %s2, %s50
      %s52 = sshll.u32 [#allocation7], 4
      %s53 = int_to_ptr.vmem [resolvable:$true] %s52
      %58 = dma.hbm_to_vmem [thread:$0]  %s51, 256, %s53, [#allocation6], 128, 128, 8
    $region13: #{tpu_custom_call.1} parent=1 // pred_fallthru
      _
    // Predicated region
    $region14: #{tpu_custom_call.1} parent=1 // pred_check
      _
    $region15: #{tpu_custom_call.1} parent=1 // pred_check_branch
      %60 = sbr.rel (0) target = $region17
    $region16: #{tpu_custom_call.1} parent=1 // pred_region
      %61 = dma.done [#allocation3], 256
    $region17: #{tpu_custom_call.1} parent=1 // pred_fallthru
      _
    // Predicated region
    $region18: #{tpu_custom_call.1} parent=1 // pred_check
      _
    $region19: #{tpu_custom_call.1} parent=1 // pred_check_branch
      %63 = sbr.rel (0) target = $region21
    $region20: #{tpu_custom_call.1} parent=1 // pred_region
      %64 = dma.done [#allocation6], 256
    $region21: #{tpu_custom_call.1} parent=1 // pred_fallthru
      _
    // Predicated region
    $region22: #{tpu_custom_call.1} parent=1 // pred_check
      _
    $region23: #{tpu_custom_call.1} parent=1 // pred_check_branch
      %66 = sbr.rel (0) target = $region25
    $region24: #{tpu_custom_call.1} parent=1 // pred_region
      %67 = dma.done [#allocation6], 256
    $region25: #{tpu_custom_call.1} parent=1 // pred_fallthru
      _
    %s68 = sadd.s32 0, 0
    %s69 = smul.u32 2, %s68
    %s70 = sadd.s32 0, 0
    %s71 = smul.u32 2, %s70
    %s72 = sadd.s32 0, 0
    %s73 = smul.u32 2, %s72
    %p74 = scmp.eq.s32.totalorder 0, 0
    // Predicated region
    $region26: #{tpu_custom_call.1} parent=1 // pred_check
      %p75 = pneg %p74
    $region27: #{tpu_custom_call.1} parent=1 // pred_check_branch
      %77 = sbr.rel (%p75) target = $region29
    $region28: #{tpu_custom_call.1} parent=1 // pred_region
      %78 = vst [vmem:[#allocation8] sm:$0xff] 0.0
    $region29: #{tpu_custom_call.1} parent=1 // pred_fallthru
      _
    %v79 = vld [vmem:[#allocation2] sm:$0xff]
    %v80 = vld [vmem:[#allocation2 + $0x8] sm:$0xff]
    %v81 = vld [vmem:[#allocation5] sm:$0xff]
    %v82 = vld [vmem:[#allocation5 + $0x8] sm:$0xff]
    %v83 = vsub.f32 %v79, %v81
    %v84 = vsub.f32 %v80, %v82
    %v85 = vmul.f32 %v83, %v83
    %v86 = vmul.f32 %v84, %v84
    %v87 = vld [vmem:[#allocation7] sm:$0xff]
    %v88 = vld [vmem:[#allocation7 + $0x8] sm:$0xff]
    %v89 = vmul.f32 %v85, %v87
    %v90 = vmul.f32 %v86, %v88
    %v91 = vadd.f32 %v89, %v90
    %v92 = vld [vmem:[#allocation8] sm:$0xff]
    %v93 = vadd.f32 %v92, %v91
    %94 = vst [vmem:[#allocation8] sm:$0xff] %v93
    // Predicated region
    $region30: #{tpu_custom_call.1} parent=1 // pred_check
      _
    $region31: #{tpu_custom_call.1} parent=1 // pred_check_branch
      %96 = sbr.rel (0) target = $region33
    $region32: #{tpu_custom_call.1} parent=1 // pred_region
      %s98 = ssub.s32 128, 128
      %99 = vsyncadd [#allocation4], %s98
      %s101 = sshll.u32 [#allocation8], 4
      %s102 = int_to_ptr.vmem [resolvable:$true] %s101
      %104 = dma.vmem_to_hbm [thread:$0]  %s102, 128, %s3, [#allocation4]
    $region33: #{tpu_custom_call.1} parent=1 // pred_fallthru
      _
    // Predicated region
    $region34: #{tpu_custom_call.1} parent=1 // pred_check
      _
    $region35: #{tpu_custom_call.1} parent=1 // pred_check_branch
      %106 = sbr.rel (0) target = $region37
    $region36: #{tpu_custom_call.1} parent=1 // pred_region
      %107 = dma.done [#allocation4], 128
    $region37: #{tpu_custom_call.1} parent=1 // pred_fallthru
      _
    %108 = vsyncpa [#allocation3], 1
    %109 = vsyncpa [#allocation6], 1
    %110 = vsyncpa [#allocation4], 1

</llo_original>
